<compile_context>
chip_gen: v7x
topology: tpu7x:2x2x1
jax: 0.10.0
libtpu: 0.0.40
codegen_flags: <defaults>
</compile_context>

<pallas_src>
import math
import functools

import jax
import jax.numpy as jnp
from jax import lax
from jax.experimental import pallas as pl
from jax.experimental.pallas import tpu as pltpu


def _arc_margin_kernel(xn_ref, w_ref, label_ref, out_ref, *,
                       s, cos_m, sin_m, th, mm, easy_margin, block_c):
    # xn_ref    : [B, F]   matmul dtype, pre-normalized in the wrapper, resident
    # w_ref     : [TC, F]  matmul dtype, raw (un-normalized) weight tile, streamed
    # label_ref : [B, 1]   int32, resident
    # out_ref   : [B, TC]
    xn = xn_ref[...]
    w = w_ref[...]
    lbl = label_ref[...]

    # Raw inner products on the MXU, f32 accumulation: [B, TC].
    dots = lax.dot_general(xn, w,
                           dimension_numbers=(((1,), (1,)), ((), ())),
                           preferred_element_type=jnp.float32)

    # Per-class squared norms reduced over F on the MXU via a ones row.  The
    # result lands directly in [1, TC] lane layout (no transpose / XLU
    # cross-lane reduce) and broadcasts over the [B, TC] dots.
    w32 = w.astype(jnp.float32)
    ones_row = jnp.ones((1, w32.shape[1]), jnp.float32)
    ssq = lax.dot_general(ones_row, w32 * w32,
                          dimension_numbers=(((1,), (1,)), ((), ())),
                          preferred_element_type=jnp.float32)          # [1, TC]
    inv_wn = lax.rsqrt(jnp.maximum(ssq, 1e-24))                        # [1, TC]

    cosine = dots * inv_wn                                             # [B, TC]

    # Margin math in f32 (matches the torch module, incl. clamp(max=1) + 1e-6).
    sine = jnp.sqrt(1.0 - jnp.minimum(cosine * cosine, 1.0) + 1e-6)
    phi = cosine * cos_m - sine * sin_m
    if easy_margin:
        phi = jnp.where(cosine > 0.0, phi, cosine)
    else:
        phi = jnp.where(cosine - th > 0.0, phi, cosine - mm)

    # one_hot.scatter_(1, label, 1) -> single select vs. the GLOBAL column id.
    col0 = pl.program_id(0) * block_c
    col_ids = col0 + lax.broadcasted_iota(jnp.int32, cosine.shape, 1)
    out = jnp.where(col_ids == lbl, phi, cosine) * s
    out_ref[...] = out.astype(out_ref.dtype)


def arc_margin_product(x, weight, label, *, s=32.0, m=0.5, easy_margin=False,
                       block_c=2048, matmul_dtype=jnp.bfloat16,
                       out_dtype=jnp.float32):
    """Pallas TPU implementation of ArcMarginProduct.forward(x, label)."""
    B, F = x.shape
    C, F2 = weight.shape
    assert F == F2
    assert block_c % 128 == 0 and block_c >= 128

    # ---- One-off wrapper work (x is tiny: [B, F]) ---------------------------
    # F.normalize(x, dim=1) in f32, pre-cast to the MXU operand dtype.
    x32 = x.astype(jnp.float32)
    xn = x32 * lax.rsqrt(
        jnp.maximum(jnp.sum(x32 * x32, axis=-1, keepdims=True), 1e-24))
    xn = xn.astype(matmul_dtype)

    # Stream W in the matmul dtype (bf16 default: halves the HBM stream).
    w = weight.astype(matmul_dtype)
    label2d = label.reshape(B, 1).astype(jnp.int32)

    # ---- Per-generation tile sizing & VMEM budget ---------------------------
    try:
        vmem_cap = int(pltpu.get_tpu_info().vmem_capacity_bytes)
    except Exception:
        vmem_cap = 64 << 20  # conservative (v7x per-TC size)

    w_isz = jnp.dtype(matmul_dtype).itemsize
    o_isz = jnp.dtype(out_dtype).itemsize

    def _vmem_need(tc_):
        return (2 * tc_ * F * w_isz        # W tile, double-buffered
                + 2 * B * tc_ * o_isz      # out tile, double-buffered
                + 2 * B * F * w_isz        # resident normalized x
                + 2 * B * 4                # resident label
                + (2 << 20))               # misc headroom

    tc = min(block_c, ((C + 127) // 128) * 128)
    budget = int(0.55 * vmem_cap)          # leave room for compiler scratch
    while tc > 128 and _vmem_need(tc) > budget:
        tc -= 128

    n_tiles = pl.cdiv(C, tc)
    c_pad = n_tiles * tc
    if c_pad != C:
        # Zero rows -> clamped ssq -> cosine 0 in padded cols; sliced off below.
        w = jnp.pad(w, ((0, c_pad - C), (0, 0)))

    kernel = functools.partial(
        _arc_margin_kernel,
        s=float(s), cos_m=math.cos(m), sin_m=math.sin(m),
        th=math.cos(math.pi - m), mm=math.sin(math.pi - m) * m,
        easy_margin=easy_margin, block_c=tc)

    # Never request all of physical VMEM (v7x has only 64 MiB per TC).
    vmem_limit = int(min(max(_vmem_need(tc) + (8 << 20), 32 << 20),
                         int(0.75 * vmem_cap)))

    # TODO(synk): for very large B add a batch grid axis (class tile OUTER,
    # batch INNER, W index_map depending only on the outer index) so the CxF
    # weight matrix is streamed from HBM exactly once.
    out = pl.pallas_call(
        kernel,
        out_shape=jax.ShapeDtypeStruct((B, c_pad), out_dtype),
        grid_spec=pltpu.PrefetchScalarGridSpec(
            num_scalar_prefetch=0,
            grid=(n_tiles,),
            in_specs=[
                pl.BlockSpec((B, F), lambda j: (0, 0)),    # xn: VMEM-resident
                pl.BlockSpec((tc, F), lambda j: (j, 0)),   # W: streamed over C
                pl.BlockSpec((B, 1), lambda j: (0, 0)),    # label: resident
            ],
            out_specs=pl.BlockSpec((B, tc), lambda j: (0, j)),
        ),
        compiler_params=pltpu.CompilerParams(
            dimension_semantics=("parallel",),             # shard C tiles (v7x)
            vmem_limit_bytes=vmem_limit,
        ),
    )(xn, w, label2d)

    return out[:, :C]


# ----------------------------- references -----------------------------------
def _margin(cosine, lbl, *, s, m, easy_margin):
    cos_m, sin_m = math.cos(m), math.sin(m)
    th = math.cos(math.pi - m)
    mm = math.sin(math.pi - m) * m
    sine = jnp.sqrt(1.0 - jnp.minimum(cosine * cosine, 1.0) + 1e-6)
    phi = cosine * cos_m - sine * sin_m
    if easy_margin:
        phi = jnp.where(cosine > 0.0, phi, cosine)
    else:
        phi = jnp.where(cosine - th > 0.0, phi, cosine - mm)
    col = jnp.arange(cosine.shape[1], dtype=jnp.int32)[None, :]
    one_hot_mask = col == lbl.reshape(-1, 1).astype(jnp.int32)
    return jnp.where(one_hot_mask, phi, cosine) * s


def _reference_f32(x, w, lbl, *, s=32.0, m=0.5, easy_margin=False):
    """PyTorch-faithful forward in pure f32 (semantic reference)."""
    x = x.astype(jnp.float32)
    w = w.astype(jnp.float32)
    xn = x / jnp.maximum(jnp.linalg.norm(x, axis=-1, keepdims=True), 1e-12)
    wn = w / jnp.maximum(jnp.linalg.norm(w, axis=-1, keepdims=True), 1e-12)
    cosine = xn @ wn.T
    return _margin(cosine, lbl, s=s, m=m, easy_margin=easy_margin)


def _reference_mirrored(x, w, lbl, *, s=32.0, m=0.5, easy_margin=False,
                        matmul_dtype=jnp.bfloat16):
    """Mirrors the kernel's dtype path (bf16 operands, scale-after-dot)."""
    x32 = x.astype(jnp.float32)
    xn = (x32 * lax.rsqrt(
        jnp.maximum(jnp.sum(x32 * x32, -1, keepdims=True), 1e-24))
          ).astype(matmul_dtype)
    wq = w.astype(matmul_dtype)
    dots = lax.dot_general(xn, wq, (((1,), (1,)), ((), ())),
                           preferred_element_type=jnp.float32)
    w32 = wq.astype(jnp.float32)
    inv_wn = lax.rsqrt(jnp.maximum(jnp.sum(w32 * w32, -1, keepdims=True), 1e-24))
    cosine = dots * inv_wn.T
    return _margin(cosine, lbl, s=s, m=m, easy_margin=easy_margin)


if __name__ == "__main__":
    key = jax.random.PRNGKey(0)

    # --- Check 1: module-default shapes (in_feature=17, out_feature=2) ------
    B, IN_F, OUT_F = 8, 17, 2
    kx, kw, kl, key = jax.random.split(key, 4)
    x = jax.random.normal(kx, (B, IN_F), dtype=jnp.float32)
    bound = math.sqrt(6.0 / (IN_F + OUT_F))                # xavier_uniform_
    weight = jax.random.uniform(kw, (OUT_F, IN_F), dtype=jnp.float32,
                                minval=-bound, maxval=bound)
    label = jax.random.randint(kl, (B,), 0, OUT_F, dtype=jnp.int32)

    out = arc_margin_product(x, weight, label, s=32.0, m=0.5, easy_margin=False)
    out = jax.block_until_ready(out)
    assert out.shape == (B, OUT_F)
    assert bool(jnp.allclose(out, _reference_mirrored(x, weight, label),
                             atol=1e-1, rtol=1e-2)), "check1: mirrored mismatch"
    assert bool(jnp.allclose(out, _reference_f32(x, weight, label),
                             atol=1.0, rtol=0.0)), "check1: semantic mismatch"

    # --- Check 2: multi-tile class grid (global one-hot columns + trailing
    #     tile padding): C=300 with block_c=128 -> 3 grid steps --------------
    B2, F2, C2 = 8, 64, 300
    kx2, kw2, kl2, key = jax.random.split(key, 4)
    x2 = jax.random.normal(kx2, (B2, F2), dtype=jnp.float32)
    bound2 = math.sqrt(6.0 / (F2 + C2))
    w2 = jax.random.uniform(kw2, (C2, F2), dtype=jnp.float32,
                            minval=-bound2, maxval=bound2)
    l2 = jax.random.randint(kl2, (B2,), 0, C2, dtype=jnp.int32)

    out2 = arc_margin_product(x2, w2, l2, s=32.0, m=0.5, easy_margin=False,
                              block_c=128)
    out2 = jax.block_until_ready(out2)
    assert out2.shape == (B2, C2)
    assert bool(jnp.allclose(out2, _reference_mirrored(x2, w2, l2),
                             atol=1e-1, rtol=1e-2)), "check2: mirrored mismatch"
    assert bool(jnp.allclose(out2, _reference_f32(x2, w2, l2),
                             atol=1.0, rtol=0.0)), "check2: semantic mismatch"

    print("KERNEL_OK")
</pallas_src>

<mosaic_0001>
module attributes {stable_mosaic.version = 11 : i64} {
  func.func @_arc_margin_kernel(%arg0: i32, %arg1: memref<8x17xbf16, #tpu.memory_space<vmem>>, %arg2: memref<128x17xbf16, #tpu.memory_space<vmem>>, %arg3: memref<8x1xi32, #tpu.memory_space<vmem>>, %arg4: memref<8x128xf32, #tpu.memory_space<vmem>>) attributes {dimension_semantics = [#tpu.dimension_semantics<parallel>], iteration_bounds = array<i64: 1>, scalar_prefetch = 0 : i64, scratch_operands = 0 : i64, tpu.core_type = #tpu.core_type<tc>, window_params = [{pipeline_mode = #tpu.pipeline_mode<synchronous>, transform_indices = @transform_0, window_bounds = array<i64: 8, 17>}, {transform_indices = @transform_1, window_bounds = array<i64: 128, 17>}, {pipeline_mode = #tpu.pipeline_mode<synchronous>, transform_indices = @transform_2, window_bounds = array<i64: 8, 1>}, {transform_indices = @transform_3, window_bounds = array<i64: 8, 128>}]} {
    %c0 = arith.constant 0 : index
    %c0_0 = arith.constant 0 : index
    %0 = vector.load %arg1[%c0, %c0_0] : memref<8x17xbf16, #tpu.memory_space<vmem>>, vector<8x17xbf16>
    %c0_1 = arith.constant 0 : index
    %c0_2 = arith.constant 0 : index
    %1 = vector.load %arg2[%c0_1, %c0_2] : memref<128x17xbf16, #tpu.memory_space<vmem>>, vector<128x17xbf16>
    %c0_3 = arith.constant 0 : index
    %c0_4 = arith.constant 0 : index
    %2 = vector.load %arg3[%c0_3, %c0_4] : memref<8x1xi32, #tpu.memory_space<vmem>>, vector<8x1xi32>
    %cst = arith.constant dense<0.000000e+00> : vector<8x128xf32>
    %3 = tpu.matmul %0, %1, %cst {dimension_numbers = #tpu.dot_dimension_numbers<[1], [1], [0], [0], [0, 0, 1, 0], [], []>} : vector<8x17xbf16>, vector<128x17xbf16>, vector<8x128xf32> -> vector<8x128xf32>
    %4 = arith.extf %1 : vector<128x17xbf16> to vector<128x17xf32>
    %cst_5 = arith.constant 1.000000e+00 : f32
    %5 = vector.broadcast %cst_5 : f32 to vector<1x17xf32>
    %6 = arith.mulf %4, %4 : vector<128x17xf32>
    %cst_6 = arith.constant dense<0.000000e+00> : vector<1x128xf32>
    %7 = tpu.matmul %5, %6, %cst_6 {dimension_numbers = #tpu.dot_dimension_numbers<[1], [1], [0], [0], [0, 0, 1, 0], [], []>} : vector<1x17xf32>, vector<128x17xf32>, vector<1x128xf32> -> vector<1x128xf32>
    %cst_7 = arith.constant 1.000000e-24 : f32
    %8 = vector.broadcast %cst_7 : f32 to vector<1x128xf32>
    %9 = arith.maximumf %7, %8 : vector<1x128xf32>
    %10 = math.rsqrt %9 : vector<1x128xf32>
    %11 = vector.broadcast %10 : vector<1x128xf32> to vector<8x128xf32>
    %12 = arith.mulf %3, %11 : vector<8x128xf32>
    %13 = arith.mulf %12, %12 : vector<8x128xf32>
    %cst_8 = arith.constant 1.000000e+00 : f32
    %14 = vector.broadcast %cst_8 : f32 to vector<8x128xf32>
    %15 = arith.minimumf %13, %14 : vector<8x128xf32>
    %cst_9 = arith.constant 1.000000e+00 : f32
    %16 = vector.broadcast %cst_9 : f32 to vector<8x128xf32>
    %17 = arith.subf %16, %15 : vector<8x128xf32>
    %cst_10 = arith.constant 9.99999997E-7 : f32
    %18 = vector.broadcast %cst_10 : f32 to vector<8x128xf32>
    %19 = arith.addf %17, %18 : vector<8x128xf32>
    %20 = math.sqrt %19 : vector<8x128xf32>
    %cst_11 = arith.constant 0.87758255 : f32
    %21 = vector.broadcast %cst_11 : f32 to vector<8x128xf32>
    %22 = arith.mulf %12, %21 : vector<8x128xf32>
    %cst_12 = arith.constant 0.47942555 : f32
    %23 = vector.broadcast %cst_12 : f32 to vector<8x128xf32>
    %24 = arith.mulf %20, %23 : vector<8x128xf32>
    %25 = arith.subf %22, %24 : vector<8x128xf32>
    %cst_13 = arith.constant -0.87758255 : f32
    %26 = vector.broadcast %cst_13 : f32 to vector<8x128xf32>
    %27 = arith.subf %12, %26 : vector<8x128xf32>
    %cst_14 = arith.constant 0.000000e+00 : f32
    %28 = vector.broadcast %cst_14 : f32 to vector<8x128xf32>
    %29 = arith.cmpf ogt, %27, %28 : vector<8x128xf32>
    %cst_15 = arith.constant 0.239712775 : f32
    %30 = vector.broadcast %cst_15 : f32 to vector<8x128xf32>
    %31 = arith.subf %12, %30 : vector<8x128xf32>
    %32 = arith.select %29, %25, %31 : vector<8x128xi1>, vector<8x128xf32>
    %c128_i32 = arith.constant 128 : i32
    %33 = arith.muli %arg0, %c128_i32 : i32
    %34 = tpu.iota {dimensions = array<i32: 1>} : vector<8x128xi32>
    %35 = vector.broadcast %33 : i32 to vector<8x128xi32>
    %36 = arith.addi %35, %34 : vector<8x128xi32>
    %37 = vector.broadcast %2 : vector<8x1xi32> to vector<8x128xi32>
    %38 = arith.cmpi eq, %36, %37 : vector<8x128xi32>
    %39 = arith.select %38, %32, %12 : vector<8x128xi1>, vector<8x128xf32>
    %cst_16 = arith.constant 3.200000e+01 : f32
    %40 = vector.broadcast %cst_16 : f32 to vector<8x128xf32>
    %41 = arith.mulf %39, %40 : vector<8x128xf32>
    %c0_17 = arith.constant 0 : index
    %c0_18 = arith.constant 0 : index
    %42 = vector.load %arg4[%c0_17, %c0_18] : memref<8x128xf32, #tpu.memory_space<vmem>>, vector<8x128xf32>
    tpu.vector_store %arg4[%c0_17, %c0_18], %41 {strides = array<i32>} : memref<8x128xf32, #tpu.memory_space<vmem>>, vector<8x128xf32>,
    return
  }
  func.func @transform_0(%arg0: i32) -> (i32, i32) {
    %c0_i32 = arith.constant 0 : i32
    %c0_i32_0 = arith.constant 0 : i32
    %c0_i32_1 = arith.constant 0 : i32
    return %c0_i32, %c0_i32_0 : i32, i32
  }
  func.func @transform_1(%arg0: i32) -> (i32, i32) {
    %c0_i32 = arith.constant 0 : i32
    %c0_i32_0 = arith.constant 0 : i32
    return %arg0, %c0_i32 : i32, i32
  }
  func.func @transform_2(%arg0: i32) -> (i32, i32) {
    %c0_i32 = arith.constant 0 : i32
    %c0_i32_0 = arith.constant 0 : i32
    %c0_i32_1 = arith.constant 0 : i32
    return %c0_i32, %c0_i32_0 : i32, i32
  }
  func.func @transform_3(%arg0: i32) -> (i32, i32) {
    %c0_i32 = arith.constant 0 : i32
    %c0_i32_0 = arith.constant 0 : i32
    return %c0_i32, %arg0 : i32, i32
  }
}

</mosaic_0001>

<llo_original>
// kernel: tpu_custom_call.1
$region0: #{tpu_custom_call.1}
  #allocation0 [shape = 'u32[]', space=smem, size = 0x4, offset = 0x4, fixed_abs, tag = 'smem constant byte address 0x4 - core index']
  #allocation1 [shape = 'u32[144,128]{1,0:T(1,128)}', space=vmem, size = 0x12000, scoped, tag = 'internal scratch']
  %s0 = inlined_call_operand.vmem [shape: bf16[8,17], index: 0, kind: input, shape index: {}]
  %s1 = inlined_call_operand.vmem [shape: bf16[128,17], index: 1, kind: input, shape index: {}]
  %s2 = inlined_call_operand.vmem [shape: s32[8,1], index: 2, kind: input, shape index: {}]
  %s3 = inlined_call_operand.hbm [shape: f32[8,128], index: 3, kind: output, shape index: {}]
  %s4 = sld [smem:[#allocation0]]
  $region22: #{tpu_custom_call.1} parent=0
    _
  %s6 = ssub.s32 1, %s4
  %s7 = scalar_select 0, %s6, %s4
  $region1: #{tpu_custom_call.1} parent=0
    #allocation2 [shape = 'u8[4096]{0}', space=vmem, size = 0x1000, scoped, tag = 'output window, operand 0, single buffered']
    #allocation3 [shape = 's32[1]{0}', space=sflag, size = 0x4, scoped, tag = 'scoped memory for tpu_custom_call.1']
    %8 = vsyncpa [#allocation3], 0
    // Predicated region
    $region2: #{tpu_custom_call.1} parent=1 // pred_check
      _
    $region3: #{tpu_custom_call.1} parent=1 // pred_check_branch
      %10 = sbr.rel (0) target = $region5
    $region4: #{tpu_custom_call.1} parent=1 // pred_region
      _
    $region5: #{tpu_custom_call.1} parent=1 // pred_fallthru
      _
    // Predicated region
    $region6: #{tpu_custom_call.1} parent=1 // pred_check
      _
    $region7: #{tpu_custom_call.1} parent=1 // pred_check_branch
      %12 = sbr.rel (0) target = $region9
    $region8: #{tpu_custom_call.1} parent=1 // pred_region
      _
    $region9: #{tpu_custom_call.1} parent=1 // pred_fallthru
      _
    // Predicated region
    $region10: #{tpu_custom_call.1} parent=1 // pred_check
      _
    $region11: #{tpu_custom_call.1} parent=1 // pred_check_branch
      %14 = sbr.rel (0) target = $region13
    $region12: #{tpu_custom_call.1} parent=1 // pred_region
      _
    $region13: #{tpu_custom_call.1} parent=1 // pred_fallthru
      _
    %v16 = vld [vmem:[%s0] sm:$0xf]
    %v17 = vld [vmem:[%s1] sm:$0xf]
    %v18 = vld [vmem:[%s1 + $0x4] sm:$0xf]
    %v19 = vld [vmem:[%s1 + $0x8] sm:$0xf]
    %v20 = vld [vmem:[%s1 + $0xc] sm:$0xf]
    %v21 = vld [vmem:[%s1 + $0x10] sm:$0xf]
    %v22 = vld [vmem:[%s1 + $0x14] sm:$0xf]
    %v23 = vld [vmem:[%s1 + $0x18] sm:$0xf]
    %v24 = vld [vmem:[%s1 + $0x1c] sm:$0xf]
    %v25 = vld [vmem:[%s1 + $0x20] sm:$0xf]
    %v26 = vld [vmem:[%s1 + $0x24] sm:$0xf]
    %v27 = vld [vmem:[%s1 + $0x28] sm:$0xf]
    %v28 = vld [vmem:[%s1 + $0x2c] sm:$0xf]
    %v29 = vld [vmem:[%s1 + $0x30] sm:$0xf]
    %v30 = vld [vmem:[%s1 + $0x34] sm:$0xf]
    %v31 = vld [vmem:[%s1 + $0x38] sm:$0xf]
    %v32 = vld [vmem:[%s1 + $0x3c] sm:$0xf]
    %v33 = vld [vmem:[%s2] sm:$0xff]
    %v50 = vunpack.c.l.b16 %v17
    %v51 = vunpack.c.l.b16 %v18
    %v52 = vunpack.c.l.b16 %v19
    %v53 = vunpack.c.l.b16 %v20
    %v54 = vunpack.c.l.b16 %v21
    %v55 = vunpack.c.l.b16 %v22
    %v56 = vunpack.c.l.b16 %v23
    %v57 = vunpack.c.l.b16 %v24
    %v58 = vunpack.c.l.b16 %v25
    %v59 = vunpack.c.l.b16 %v26
    %v60 = vunpack.c.l.b16 %v27
    %v61 = vunpack.c.l.b16 %v28
    %v62 = vunpack.c.l.b16 %v29
    %v63 = vunpack.c.l.b16 %v30
    %v64 = vunpack.c.l.b16 %v31
    %v65 = vunpack.c.l.b16 %v32
    %v66 = vpack.c.b16 %v51, %v50
    %v67 = vpack.c.b16 %v53, %v52
    %v68 = vpack.c.b16 %v55, %v54
    %v69 = vpack.c.b16 %v57, %v56
    %v70 = vpack.c.b16 %v59, %v58
    %v71 = vpack.c.b16 %v61, %v60
    %v72 = vpack.c.b16 %v63, %v62
    %v73 = vpack.c.b16 %v65, %v64
    %vm74 = vcmask 138240
    %v76 = vsel %vm74, %v16, 0
    %v79 = vsel %vm74, %v66, 0
    %v82 = vsel %vm74, %v67, 0
    %v85 = vsel %vm74, %v68, 0
    %v88 = vsel %vm74, %v69, 0
    %v91 = vsel %vm74, %v70, 0
    %v94 = vsel %vm74, %v71, 0
    %v97 = vsel %vm74, %v72, 0
    %v100 = vsel %vm74, %v73, 0
    %102 = vmatprep.subr.bf16.mxu0 0
    %103 = vmatpush1.bf16.xpose.msra.mxu0 %v79
    %104 = vmatprep.subr.bf16.mxu0 0
    %105 = vmatpush1.bf16.xpose.msra.mxu0 %v82
    %106 = vmatprep.subr.bf16.mxu0 0
    %107 = vmatpush1.bf16.xpose.msra.mxu0 %v85
    %108 = vmatprep.subr.bf16.mxu0 0
    %109 = vmatpush1.bf16.xpose.msra.mxu0 %v88
    %110 = vmatprep.subr.bf16.mxu0 0
    %111 = vmatpush1.bf16.xpose.msra.mxu0 %v91
    %112 = vmatprep.subr.bf16.mxu0 0
    %113 = vmatpush1.bf16.xpose.msra.mxu0 %v94
    %114 = vmatprep.subr.bf16.mxu0 0
    %115 = vmatpush1.bf16.xpose.msra.mxu0 %v97
    %116 = vmatprep.subr.bf16.mxu0 0
    %117 = vmatpush1.bf16.xpose.msra.mxu0 %v100
    %118 = vmatprep.subr.bf16.mxu0 0
    %119 = vmatpush1.bf16.xpose.msra.mxu0 0
    %120 = vmatprep.subr.bf16.mxu0 0
    %121 = vmatpush1.bf16.xpose.msra.mxu0 0
    %122 = vmatprep.subr.bf16.mxu0 0
    %123 = vmatpush1.bf16.xpose.msra.mxu0 0
    %124 = vmatprep.subr.bf16.mxu0 0
    %125 = vmatpush1.bf16.xpose.msra.mxu0 0
    %126 = vmatprep.subr.bf16.mxu0 0
    %127 = vmatpush1.bf16.xpose.msra.mxu0 0
    %128 = vmatprep.subr.bf16.mxu0 0
    %129 = vmatpush1.bf16.xpose.msra.mxu0 0
    %130 = vmatprep.subr.bf16.mxu0 0
    %131 = vmatpush1.bf16.xpose.msra.mxu0 0
    %132 = vmatprep.subr.bf16.mxu0 0
    %133 = vmatpush1.bf16.xpose.msra.mxu0 0
    %134 = vmatprep.mubr.bf16.mxu0 0
    %135 = vmatmul.mubr.bf16.gmra.mrb[0].mxu0 %v76
    %v136 = vpop.f32.mrb[0].mxu0
    %v137 = vadd.f32 0.0, %v136
    %v138 = vpop.f32.mrb[0].mxu0
    %v139 = vpop.f32.mrb[0].mxu0
    %v140 = vpop.f32.mrb[0].mxu0
    %141 = vdwg.mxu0
    %v142 = vunpack.c.l.bf16 %v17
    %v143 = vunpack.c.l.bf16 %v18
    %v144 = vunpack.c.l.bf16 %v19
    %v145 = vunpack.c.l.bf16 %v20
    %v146 = vunpack.c.l.bf16 %v21
    %v147 = vunpack.c.l.bf16 %v22
    %v148 = vunpack.c.l.bf16 %v23
    %v149 = vunpack.c.l.bf16 %v24
    %v150 = vunpack.c.l.bf16 %v25
    %v151 = vunpack.c.l.bf16 %v26
    %v152 = vunpack.c.l.bf16 %v27
    %v153 = vunpack.c.l.bf16 %v28
    %v154 = vunpack.c.l.bf16 %v29
    %v155 = vunpack.c.l.bf16 %v30
    %v156 = vunpack.c.l.bf16 %v31
    %v157 = vunpack.c.l.bf16 %v32
    %v158 = vmul.f32 %v142, %v142
    %v159 = vmul.f32 %v143, %v143
    %v160 = vmul.f32 %v144, %v144
    %v161 = vmul.f32 %v145, %v145
    %v162 = vmul.f32 %v146, %v146
    %v163 = vmul.f32 %v147, %v147
    %v164 = vmul.f32 %v148, %v148
    %v165 = vmul.f32 %v149, %v149
    %v166 = vmul.f32 %v150, %v150
    %v167 = vmul.f32 %v151, %v151
    %v168 = vmul.f32 %v152, %v152
    %v169 = vmul.f32 %v153, %v153
    %v170 = vmul.f32 %v154, %v154
    %v171 = vmul.f32 %v155, %v155
    %v172 = vmul.f32 %v156, %v156
    %v173 = vmul.f32 %v157, %v157
    %v175 = vsel %vm74, 1.0, 0
    %v178 = vsel %vm74, %v158, 0
    %v181 = vsel %vm74, %v159, 0
    %v184 = vsel %vm74, %v160, 0
    %v187 = vsel %vm74, %v161, 0
    %v190 = vsel %vm74, %v162, 0
    %v193 = vsel %vm74, %v163, 0
    %v196 = vsel %vm74, %v164, 0
    %v199 = vsel %vm74, %v165, 0
    %v202 = vsel %vm74, %v166, 0
    %v205 = vsel %vm74, %v167, 0
    %v208 = vsel %vm74, %v168, 0
    %v211 = vsel %vm74, %v169, 0
    %v214 = vsel %vm74, %v170, 0
    %v217 = vsel %vm74, %v171, 0
    %v220 = vsel %vm74, %v172, 0
    %v223 = vsel %vm74, %v173, 0
    %225 = vmatprep.subr.mxu0 0.0
    %226 = vmatpush1.xpose.msra.mxu0 %v178
    %227 = vmatprep.subr.mxu0 0.0
    %228 = vmatpush1.xpose.msra.mxu0 %v181
    %229 = vmatprep.subr.mxu0 0.0
    %230 = vmatpush1.xpose.msra.mxu0 %v184
    %231 = vmatprep.subr.mxu0 0.0
    %232 = vmatpush1.xpose.msra.mxu0 %v187
    %233 = vmatprep.subr.mxu0 0.0
    %234 = vmatpush1.xpose.msra.mxu0 %v190
    %235 = vmatprep.subr.mxu0 0.0
    %236 = vmatpush1.xpose.msra.mxu0 %v193
    %237 = vmatprep.subr.mxu0 0.0
    %238 = vmatpush1.xpose.msra.mxu0 %v196
    %239 = vmatprep.subr.mxu0 0.0
    %240 = vmatpush1.xpose.msra.mxu0 %v199
    %241 = vmatprep.subr.mxu0 0.0
    %242 = vmatpush1.xpose.msra.mxu0 %v202
    %243 = vmatprep.subr.mxu0 0.0
    %244 = vmatpush1.xpose.msra.mxu0 %v205
    %245 = vmatprep.subr.mxu0 0.0
    %246 = vmatpush1.xpose.msra.mxu0 %v208
    %247 = vmatprep.subr.mxu0 0.0
    %248 = vmatpush1.xpose.msra.mxu0 %v211
    %249 = vmatprep.subr.mxu0 0.0
    %250 = vmatpush1.xpose.msra.mxu0 %v214
    %251 = vmatprep.subr.mxu0 0.0
    %252 = vmatpush1.xpose.msra.mxu0 %v217
    %253 = vmatprep.subr.mxu0 0.0
    %254 = vmatpush1.xpose.msra.mxu0 %v220
    %255 = vmatprep.subr.mxu0 0.0
    %256 = vmatpush1.xpose.msra.mxu0 %v223
    %257 = vmatprep.subr.mxu0 0.0
    %258 = vmatpush1.xpose.msra.mxu0 0.0
    %259 = vmatprep.subr.mxu0 0.0
    %260 = vmatpush1.xpose.msra.mxu0 0.0
    %261 = vmatprep.subr.mxu0 0.0
    %262 = vmatpush1.xpose.msra.mxu0 0.0
    %263 = vmatprep.subr.mxu0 0.0
    %264 = vmatpush1.xpose.msra.mxu0 0.0
    %265 = vmatprep.subr.mxu0 0.0
    %266 = vmatpush1.xpose.msra.mxu0 0.0
    %267 = vmatprep.subr.mxu0 0.0
    %268 = vmatpush1.xpose.msra.mxu0 0.0
    %269 = vmatprep.subr.mxu0 0.0
    %270 = vmatpush1.xpose.msra.mxu0 0.0
    %271 = vmatprep.subr.mxu0 0.0
    %272 = vmatpush1.xpose.msra.mxu0 0.0
    %273 = vmatprep.subr.mxu0 0.0
    %274 = vmatpush1.xpose.msra.mxu0 0.0
    %275 = vmatprep.subr.mxu0 0.0
    %276 = vmatpush1.xpose.msra.mxu0 0.0
    %277 = vmatprep.subr.mxu0 0.0
    %278 = vmatpush1.xpose.msra.mxu0 0.0
    %279 = vmatprep.subr.mxu0 0.0
    %280 = vmatpush1.xpose.msra.mxu0 0.0
    %281 = vmatprep.subr.mxu0 0.0
    %282 = vmatpush1.xpose.msra.mxu0 0.0
    %283 = vmatprep.subr.mxu0 0.0
    %284 = vmatpush1.xpose.msra.mxu0 0.0
    %285 = vmatprep.subr.mxu0 0.0
    %286 = vmatpush1.xpose.msra.mxu0 0.0
    %287 = vmatprep.subr.mxu0 0.0
    %288 = vmatpush1.xpose.msra.mxu0 0.0
    %289 = vmatprep.mubr.f32.mxu0 0.0
    %290 = vmatmul.mubr.f32.gmra.mrb[0].mxu0 %v175
    %v291 = vpop.f32.mrb[0].mxu0
    %v292 = vadd.f32 0.0, %v291
    %v293 = vpop.f32.mrb[0].mxu0
    %294 = vdwg.mxu0
    %v295 = vmax.f32 %v292, 1e-24
    %v296 = vrsqrt.pop %v295
    %v297 = vlaneseq
    %v298 = vshrl.u32 %v297, 7
    %v299 = vsub.s32 0, %v298
    %v300 = vrot.slane %v296, %v299
    %v301 = vmul.f32 %v137, %v300
    %v302 = vmul.f32 %v301, %v301
    %v303 = vmin.f32 %v302, 1.0
    %v304 = vsub.f32 1.0, %v303
    %v305 = vadd.f32 %v304, 1e-06
    %v306 = vrsqrt.pop %v305
    %v307 = vmul.f32 %v305, %v306
    %vm308 = vcmp.eq.f32.partialorder %v305, inf
    %v309 = vsel %vm308, %v305, %v307
    %vm310 = vcmp.eq.f32.partialorder %v305, 0.0
    %v311 = vand.u32 %v305, 2147483648
    %v312 = vsel %vm310, %v311, %v309
    %v313 = vmul.f32 %v301, 0.87758255
    %v314 = vmul.f32 %v312, 0.47942555
    %v315 = vsub.f32 %v313, %v314
    %v316 = vsub.f32 %v301, -0.87758255
    %vm317 = vcmp.gt.f32.partialorder %v316, 0.0
    %v318 = vsub.f32 %v301, 0.23971277
    %v319 = vsel %vm317, %v315, %v318
    %s320 = smul.u32 0, 128
    %v321 = vlaneseq
    %v322 = vand.u32 %v321, 127
    %v323 = vstv %s320
    %v324 = vadd.s32 %v323, %v322
    %325 = vset.pattern.permute.xlu0 0
    %326 = vperm.xlu0 %325, %v33
    %v327 = vpop.permute.xlu0 %326
    %vm328 = vcmp.eq.s32.totalorder %v324, %v327
    %v329 = vsel %vm328, %v319, %v301
    %v330 = vmul.f32 %v329, 32.0
    %331 = vst [vmem:[#allocation2] sm:$0xff] %v330
    // Predicated region
    $region14: #{tpu_custom_call.1} parent=1 // pred_check
      _
    $region15: #{tpu_custom_call.1} parent=1 // pred_check_branch
      %333 = sbr.rel (0) target = $region17
    $region16: #{tpu_custom_call.1} parent=1 // pred_region
      %s335 = ssub.s32 128, 128
      %336 = vsyncadd [#allocation3], %s335
      %s338 = sshll.u32 [#allocation2], 4
      %s339 = int_to_ptr.vmem [resolvable:$true] %s338
      %341 = dma.vmem_to_hbm [thread:$0]  %s339, 128, %s3, [#allocation3]
    $region17: #{tpu_custom_call.1} parent=1 // pred_fallthru
      _
    // Predicated region
    $region18: #{tpu_custom_call.1} parent=1 // pred_check
      _
    $region19: #{tpu_custom_call.1} parent=1 // pred_check_branch
      %343 = sbr.rel (0) target = $region21
    $region20: #{tpu_custom_call.1} parent=1 // pred_region
      %344 = dma.done [#allocation3], 128
    $region21: #{tpu_custom_call.1} parent=1 // pred_fallthru
      _
    %345 = vsyncpa [#allocation3], 1

</llo_original>
